<compile_context>
chip_gen: v7x
topology: tpu7x:2x2x1
jax: 0.10.0
libtpu: 0.0.40
codegen_flags: <defaults>
</compile_context>

<pallas_src>
import functools

import jax
import jax.numpy as jnp
from jax import lax
from jax.experimental import pallas as pl
from jax.experimental.pallas import tpu as pltpu

_BN_EPS = 1e-5  # nn.BatchNorm1d default eps
_VMEM_LIMIT = 32 * 1024 * 1024  # safe on v5e/v6e/v7x; far above per-step working set


def _lane_tile(dim, pref):
    """Tile for a last (lane) dimension: multiple of 128 or the full dim."""
    if dim <= pref:
        return dim
    for t in (pref, 512, 256, 128):
        if t <= dim and dim % t == 0:
            return t
    return dim


def _sublane_tile(dim, pref):
    """Tile for a second-to-last (sublane) dimension: multiple of 8 or full dim."""
    if dim <= pref:
        return dim
    t = pref
    while t >= 8:
        if dim % t == 0:
            return t
        t //= 2
    return dim


# --------------------------------------------------------------------------- #
# Kernel 1: BatchNorm1d(affine=False), training-mode stats, bf16 output.
# Grid over feature-column tiles; full batch per tile.
# --------------------------------------------------------------------------- #
def _bn_kernel(za_ref, zb_ref, a_out_ref, b_out_ref):
    def bn(x):
        x = x.astype(jnp.float32)
        mean = jnp.mean(x, axis=0, keepdims=True)
        var = jnp.mean((x - mean) ** 2, axis=0, keepdims=True)  # biased variance
        return (x - mean) * lax.rsqrt(var + _BN_EPS)

    a_out_ref[...] = bn(za_ref[...]).astype(a_out_ref.dtype)
    b_out_ref[...] = bn(zb_ref[...]).astype(b_out_ref.dtype)


# --------------------------------------------------------------------------- #
# Kernel 2: per-tile partial of on_diag + lambd * off_diag over the DxD
# cross-correlation.  off_diag is computed as total - diag (no full mask pass;
# the diagonal correction only runs on tiles with i == j).
# --------------------------------------------------------------------------- #
def _corr_kernel(a_ref, b_ref, out_ref, *, inv_n, lambd):
    a = a_ref[...]  # (N, T) bf16
    b = b_ref[...]  # (N, T) bf16
    c = lax.dot_general(
        a, b,
        dimension_numbers=(((0,), (0,)), ((), ())),  # contract over batch: a^T b
        preferred_element_type=jnp.float32,
    ) * jnp.float32(inv_n)
    # TODO(synk): torch.distributed.all_reduce(c) is a cross-device sum; single-device no-op here.

    partial = jnp.float32(lambd) * jnp.sum(c * c)

    def diag_correction():
        rows = lax.broadcasted_iota(jnp.int32, c.shape, 0)
        cols = lax.broadcasted_iota(jnp.int32, c.shape, 1)
        dm = rows == cols
        on_diag = jnp.sum(jnp.where(dm, (c - 1.0) ** 2, 0.0))
        diag_sq = jnp.sum(jnp.where(dm, c * c, 0.0))
        return on_diag - jnp.float32(lambd) * diag_sq

    partial = partial + lax.cond(
        pl.program_id(0) == pl.program_id(1),
        diag_correction,
        lambda: jnp.float32(0.0),
    )
    # Lane-dense (8,128) store; wrapper picks [::8, ::128] to recover the scalar.
    out_ref[...] = jnp.full(out_ref.shape, partial, dtype=out_ref.dtype)


# --------------------------------------------------------------------------- #
# Kernel 3: per-tile partial of sum(c_^2) for the Frobenius norm of
# c_ = bn(z_a) @ bn(z_b)^T, tiled over batch-row blocks (NxN never materialized).
# --------------------------------------------------------------------------- #
def _fro_kernel(a_ref, b_ref, out_ref):
    c2 = lax.dot_general(
        a_ref[...], b_ref[...],
        dimension_numbers=(((1,), (1,)), ((), ())),  # contract over features: a b^T
        preferred_element_type=jnp.float32,
    )
    partial = jnp.sum(c2 * c2)
    out_ref[...] = jnp.full(out_ref.shape, partial, dtype=out_ref.dtype)


def barlow_twins_head_v2(z_a, z_b, gt_label=None, *, lambd=0.0051, norm="fro",
                         rank_lambd=1.0, d_tile=None, n_tile=None):
    """JAX/Pallas equivalent of BarlowTwinsHeadV2.forward. Returns {'loss': scalar}."""
    assert norm == "fro", "only Frobenius norm supported"
    del gt_label  # unused by the PyTorch forward as well
    N, D = z_a.shape

    # ---- BN normalize both views once (hoisted out of the matmul grids) ----
    bn_t = _lane_tile(D, 512)
    a_hat, b_hat = pl.pallas_call(
        _bn_kernel,
        grid=(D // bn_t,),
        in_specs=[
            pl.BlockSpec((N, bn_t), lambda d: (0, d)),
            pl.BlockSpec((N, bn_t), lambda d: (0, d)),
        ],
        out_specs=[
            pl.BlockSpec((N, bn_t), lambda d: (0, d)),
            pl.BlockSpec((N, bn_t), lambda d: (0, d)),
        ],
        out_shape=[
            jax.ShapeDtypeStruct((N, D), jnp.bfloat16),
            jax.ShapeDtypeStruct((N, D), jnp.bfloat16),
        ],
        compiler_params=pltpu.CompilerParams(
            dimension_semantics=("parallel",),
            vmem_limit_bytes=_VMEM_LIMIT,
        ),
    )(z_a, z_b)

    # ---- on_diag + lambd * off_diag over the DxD cross-correlation ----
    td = d_tile if d_tile is not None else _lane_tile(D, 256)
    assert D % td == 0, "feature tile must divide D"
    gd = D // td
    corr_part = pl.pallas_call(
        functools.partial(_corr_kernel, inv_n=1.0 / N, lambd=float(lambd)),
        grid=(gd, gd),
        in_specs=[
            pl.BlockSpec((N, td), lambda i, j: (0, i)),
            pl.BlockSpec((N, td), lambda i, j: (0, j)),
        ],
        out_specs=pl.BlockSpec((8, 128), lambda i, j: (i, j)),
        out_shape=jax.ShapeDtypeStruct((gd * 8, gd * 128), jnp.float32),
        compiler_params=pltpu.CompilerParams(
            dimension_semantics=("parallel", "parallel"),
            vmem_limit_bytes=_VMEM_LIMIT,
        ),
    )(a_hat, b_hat)

    # ---- sum(c_^2) for the Frobenius "rank" term, tiled over batch rows ----
    tn = n_tile if n_tile is not None else _sublane_tile(N, 128)
    assert N % tn == 0, "batch tile must divide N"
    gn = N // tn
    rank_part = pl.pallas_call(
        _fro_kernel,
        grid=(gn, gn),
        in_specs=[
            pl.BlockSpec((tn, D), lambda i, j: (i, 0)),
            pl.BlockSpec((tn, D), lambda i, j: (j, 0)),
        ],
        out_specs=pl.BlockSpec((8, 128), lambda i, j: (i, j)),
        out_shape=jax.ShapeDtypeStruct((gn * 8, gn * 128), jnp.float32),
        compiler_params=pltpu.CompilerParams(
            dimension_semantics=("parallel", "parallel"),
            vmem_limit_bytes=_VMEM_LIMIT,
        ),
    )(a_hat, b_hat)

    # ---- tiny wrapper-side reduction of the per-tile partials ----
    corr = jnp.sum(corr_part[::8, ::128])          # on_diag + lambd * off_diag
    rank_sq = jnp.sum(rank_part[::8, ::128])       # ||c_||_F^2
    loss = corr - jnp.float32(rank_lambd) * jnp.sqrt(rank_sq)
    return {"loss": loss}


def _reference(z_a, z_b, lambd=0.0051, rank_lambd=1.0):
    # Pure-JAX f32 reference (same math as the PyTorch module on 1 device).
    def bn(x):
        mean = jnp.mean(x, axis=0, keepdims=True)
        var = jnp.mean((x - mean) ** 2, axis=0, keepdims=True)
        return (x - mean) / jnp.sqrt(var + _BN_EPS)

    N, D = z_a.shape
    a, b = bn(z_a), bn(z_b)
    c = (a.T @ b) / N
    on_diag = jnp.sum((jnp.diagonal(c) - 1.0) ** 2)
    off_diag = jnp.sum(c**2) - jnp.sum(jnp.diagonal(c) ** 2)
    c2 = a @ b.T
    rank = jnp.sqrt(jnp.sum(c2**2))
    return on_diag + lambd * off_diag - rank_lambd * rank


if __name__ == "__main__":
    # Small shapes consistent with the module (real default D=2048): N=64, D=256.
    # Force 2x2 grids on both matmul kernels to exercise the tiling paths.
    N, D = 64, 256
    key = jax.random.PRNGKey(0)
    ka, kb = jax.random.split(key)
    z_a = jax.random.normal(ka, (N, D), dtype=jnp.float32)
    z_b = jax.random.normal(kb, (N, D), dtype=jnp.float32)
    gt_label = jnp.zeros((N,), dtype=jnp.int32)

    losses = barlow_twins_head_v2(
        z_a, z_b, gt_label, lambd=0.0051, rank_lambd=1.0, d_tile=128, n_tile=32
    )
    loss = jax.block_until_ready(losses["loss"])

    ref = _reference(z_a, z_b)
    assert jnp.allclose(loss, ref, rtol=2e-2, atol=1e-1), (loss, ref)
    print("KERNEL_OK")
</pallas_src>

<mosaic_0001>
module attributes {stable_mosaic.version = 11 : i64} {
  func.func @_bn_kernel(%arg0: i32, %arg1: memref<64x256xf32, #tpu.memory_space<vmem>>, %arg2: memref<64x256xf32, #tpu.memory_space<vmem>>, %arg3: memref<64x256xbf16, #tpu.memory_space<vmem>>, %arg4: memref<64x256xbf16, #tpu.memory_space<vmem>>) attributes {dimension_semantics = [#tpu.dimension_semantics<parallel>], iteration_bounds = array<i64: 1>, scalar_prefetch = 0 : i64, scratch_operands = 0 : i64, tpu.core_type = #tpu.core_type<tc>, window_params = [{transform_indices = @transform_0, window_bounds = array<i64: 64, 256>}, {transform_indices = @transform_1, window_bounds = array<i64: 64, 256>}, {transform_indices = @transform_2, window_bounds = array<i64: 64, 256>}, {transform_indices = @transform_3, window_bounds = array<i64: 64, 256>}]} {
    %c0 = arith.constant 0 : index
    %c0_0 = arith.constant 0 : index
    %0 = vector.load %arg1[%c0, %c0_0] : memref<64x256xf32, #tpu.memory_space<vmem>>, vector<64x256xf32>
    %cst = arith.constant dense<0.000000e+00> : vector<256xf32>
    %1 = vector.multi_reduction <add>, %0, %cst [0] : vector<64x256xf32> to vector<256xf32>
    %2 = vector.shape_cast %1 : vector<256xf32> to vector<1x256xf32>
    %cst_1 = arith.constant 6.400000e+01 : f32
    %3 = vector.broadcast %cst_1 : f32 to vector<1x256xf32>
    %4 = arith.divf %2, %3 : vector<1x256xf32>
    %5 = vector.broadcast %4 : vector<1x256xf32> to vector<64x256xf32>
    %6 = arith.subf %0, %5 : vector<64x256xf32>
    %7 = arith.mulf %6, %6 : vector<64x256xf32>
    %cst_2 = arith.constant dense<0.000000e+00> : vector<256xf32>
    %8 = vector.multi_reduction <add>, %7, %cst_2 [0] : vector<64x256xf32> to vector<256xf32>
    %9 = vector.shape_cast %8 : vector<256xf32> to vector<1x256xf32>
    %cst_3 = arith.constant 6.400000e+01 : f32
    %10 = vector.broadcast %cst_3 : f32 to vector<1x256xf32>
    %11 = arith.divf %9, %10 : vector<1x256xf32>
    %12 = vector.broadcast %4 : vector<1x256xf32> to vector<64x256xf32>
    %13 = arith.subf %0, %12 : vector<64x256xf32>
    %cst_4 = arith.constant 9.99999974E-6 : f32
    %14 = vector.broadcast %cst_4 : f32 to vector<1x256xf32>
    %15 = arith.addf %11, %14 : vector<1x256xf32>
    %16 = math.rsqrt %15 : vector<1x256xf32>
    %17 = vector.broadcast %16 : vector<1x256xf32> to vector<64x256xf32>
    %18 = arith.mulf %13, %17 : vector<64x256xf32>
    %19 = arith.truncf %18 : vector<64x256xf32> to vector<64x256xbf16>
    %c0_5 = arith.constant 0 : index
    %c0_6 = arith.constant 0 : index
    %20 = vector.load %arg3[%c0_5, %c0_6] : memref<64x256xbf16, #tpu.memory_space<vmem>>, vector<64x256xbf16>
    tpu.vector_store %arg3[%c0_5, %c0_6], %19 {strides = array<i32>} : memref<64x256xbf16, #tpu.memory_space<vmem>>, vector<64x256xbf16>,
    %c0_7 = arith.constant 0 : index
    %c0_8 = arith.constant 0 : index
    %21 = vector.load %arg2[%c0_7, %c0_8] : memref<64x256xf32, #tpu.memory_space<vmem>>, vector<64x256xf32>
    %cst_9 = arith.constant dense<0.000000e+00> : vector<256xf32>
    %22 = vector.multi_reduction <add>, %21, %cst_9 [0] : vector<64x256xf32> to vector<256xf32>
    %23 = vector.shape_cast %22 : vector<256xf32> to vector<1x256xf32>
    %cst_10 = arith.constant 6.400000e+01 : f32
    %24 = vector.broadcast %cst_10 : f32 to vector<1x256xf32>
    %25 = arith.divf %23, %24 : vector<1x256xf32>
    %26 = vector.broadcast %25 : vector<1x256xf32> to vector<64x256xf32>
    %27 = arith.subf %21, %26 : vector<64x256xf32>
    %28 = arith.mulf %27, %27 : vector<64x256xf32>
    %cst_11 = arith.constant dense<0.000000e+00> : vector<256xf32>
    %29 = vector.multi_reduction <add>, %28, %cst_11 [0] : vector<64x256xf32> to vector<256xf32>
    %30 = vector.shape_cast %29 : vector<256xf32> to vector<1x256xf32>
    %cst_12 = arith.constant 6.400000e+01 : f32
    %31 = vector.broadcast %cst_12 : f32 to vector<1x256xf32>
    %32 = arith.divf %30, %31 : vector<1x256xf32>
    %33 = vector.broadcast %25 : vector<1x256xf32> to vector<64x256xf32>
    %34 = arith.subf %21, %33 : vector<64x256xf32>
    %cst_13 = arith.constant 9.99999974E-6 : f32
    %35 = vector.broadcast %cst_13 : f32 to vector<1x256xf32>
    %36 = arith.addf %32, %35 : vector<1x256xf32>
    %37 = math.rsqrt %36 : vector<1x256xf32>
    %38 = vector.broadcast %37 : vector<1x256xf32> to vector<64x256xf32>
    %39 = arith.mulf %34, %38 : vector<64x256xf32>
    %40 = arith.truncf %39 : vector<64x256xf32> to vector<64x256xbf16>
    %c0_14 = arith.constant 0 : index
    %c0_15 = arith.constant 0 : index
    %41 = vector.load %arg4[%c0_14, %c0_15] : memref<64x256xbf16, #tpu.memory_space<vmem>>, vector<64x256xbf16>
    tpu.vector_store %arg4[%c0_14, %c0_15], %40 {strides = array<i32>} : memref<64x256xbf16, #tpu.memory_space<vmem>>, vector<64x256xbf16>,
    return
  }
  func.func @transform_0(%arg0: i32) -> (i32, i32) {
    %c0_i32 = arith.constant 0 : i32
    %c0_i32_0 = arith.constant 0 : i32
    return %c0_i32, %arg0 : i32, i32
  }
  func.func @transform_1(%arg0: i32) -> (i32, i32) {
    %c0_i32 = arith.constant 0 : i32
    %c0_i32_0 = arith.constant 0 : i32
    return %c0_i32, %arg0 : i32, i32
  }
  func.func @transform_2(%arg0: i32) -> (i32, i32) {
    %c0_i32 = arith.constant 0 : i32
    %c0_i32_0 = arith.constant 0 : i32
    return %c0_i32, %arg0 : i32, i32
  }
  func.func @transform_3(%arg0: i32) -> (i32, i32) {
    %c0_i32 = arith.constant 0 : i32
    %c0_i32_0 = arith.constant 0 : i32
    return %c0_i32, %arg0 : i32, i32
  }
}

</mosaic_0001>

<llo_original>
// kernel: tpu_custom_call.1
$region0: #{tpu_custom_call.1}
  #allocation0 [shape = 'u32[]', space=smem, size = 0x4, offset = 0x4, fixed_abs, tag = 'smem constant byte address 0x4 - core index']
  #allocation1 [shape = 'u32[144,128]{1,0:T(1,128)}', space=vmem, size = 0x12000, scoped, tag = 'internal scratch']
  %s0 = inlined_call_operand.hbm [shape: f32[64,256], index: 0, kind: input, shape index: {}]
  %s1 = inlined_call_operand.hbm [shape: f32[64,256], index: 1, kind: input, shape index: {}]
  %s2 = inlined_call_operand.hbm [shape: bf16[64,256], index: 2, kind: output, shape index: {0}]
  %s3 = inlined_call_operand.hbm [shape: bf16[64,256], index: 3, kind: output, shape index: {1}]
  %4 = xla_tuple %s2, %s3
  %s5 = sld [smem:[#allocation0]]
  $region34: #{tpu_custom_call.1} parent=0
    _
  %s7 = ssub.s32 1, %s5
  %s8 = scalar_select 0, %s7, %s5
  $region1: #{tpu_custom_call.1} parent=0
    #allocation2 [shape = 'u8[65536]{0}', space=vmem, size = 0x10000, scoped, tag = 'input window, operand 0, single buffered']
    #allocation3 [shape = 's32[1]{0}', space=sflag, size = 0x4, scoped, tag = 'scoped memory for tpu_custom_call.1']
    #allocation4 [shape = 's32[1]{0}', space=sflag, size = 0x4, scoped, tag = 'scoped memory for tpu_custom_call.1']
    #allocation5 [shape = 'u8[65536]{0}', space=vmem, size = 0x10000, scoped, tag = 'input window, operand 1, single buffered']
    #allocation6 [shape = 's32[1]{0}', space=sflag, size = 0x4, scoped, tag = 'scoped memory for tpu_custom_call.1']
    #allocation7 [shape = 'u8[32768]{0}', space=vmem, size = 0x8000, scoped, tag = 'output window, operand 0, single buffered']
    #allocation8 [shape = 'u8[32768]{0}', space=vmem, size = 0x8000, scoped, tag = 'output window, operand 1, single buffered']
    #allocation9 [shape = 's32[1]{0}', space=sflag, size = 0x4, scoped, tag = 'scoped memory for tpu_custom_call.1']
    %9 = vsyncpa [#allocation3], 0
    %10 = vsyncpa [#allocation6], 0
    %11 = vsyncpa [#allocation4], 0
    %12 = vsyncpa [#allocation9], 0
    // Predicated region
    $region2: #{tpu_custom_call.1} parent=1 // pred_check
      _
    $region3: #{tpu_custom_call.1} parent=1 // pred_check_branch
      %14 = sbr.rel (0) target = $region5
    $region4: #{tpu_custom_call.1} parent=1 // pred_region
      %s16 = ssub.s32 2048, 2048
      %17 = vsyncadd [#allocation3], %s16
      %s18 = sshll.u32 [#allocation2], 4
      %s19 = int_to_ptr.vmem [resolvable:$true] %s18
      %24 = dma.hbm_to_vmem [thread:$0]  %s0, 2048, %s19, [#allocation3], 256, 256, 16
    $region5: #{tpu_custom_call.1} parent=1 // pred_fallthru
      _
    // Predicated region
    $region6: #{tpu_custom_call.1} parent=1 // pred_check
      _
    $region7: #{tpu_custom_call.1} parent=1 // pred_check_branch
      %26 = sbr.rel (0) target = $region9
    $region8: #{tpu_custom_call.1} parent=1 // pred_region
      %s28 = ssub.s32 2048, 2048
      %29 = vsyncadd [#allocation6], %s28
      %s30 = sshll.u32 [#allocation5], 4
      %s31 = int_to_ptr.vmem [resolvable:$true] %s30
      %36 = dma.hbm_to_vmem [thread:$0]  %s1, 2048, %s31, [#allocation6], 256, 256, 16
    $region9: #{tpu_custom_call.1} parent=1 // pred_fallthru
      _
    // Predicated region
    $region10: #{tpu_custom_call.1} parent=1 // pred_check
      _
    $region11: #{tpu_custom_call.1} parent=1 // pred_check_branch
      %38 = sbr.rel (0) target = $region13
    $region12: #{tpu_custom_call.1} parent=1 // pred_region
      %39 = dma.done [#allocation3], 2048
    $region13: #{tpu_custom_call.1} parent=1 // pred_fallthru
      _
    // Predicated region
    $region14: #{tpu_custom_call.1} parent=1 // pred_check
      _
    $region15: #{tpu_custom_call.1} parent=1 // pred_check_branch
      %41 = sbr.rel (0) target = $region17
    $region16: #{tpu_custom_call.1} parent=1 // pred_region
      %42 = dma.done [#allocation6], 2048
    $region17: #{tpu_custom_call.1} parent=1 // pred_fallthru
      _
    %v43 = vld [vmem:[#allocation2] sm:$0xff]
    %v44 = vld [vmem:[#allocation2 + $0x8] sm:$0xff]
    %v45 = vld [vmem:[#allocation2 + $0x10] sm:$0xff]
    %v46 = vld [vmem:[#allocation2 + $0x18] sm:$0xff]
    %v47 = vld [vmem:[#allocation2 + $0x20] sm:$0xff]
    %v48 = vld [vmem:[#allocation2 + $0x28] sm:$0xff]
    %v49 = vld [vmem:[#allocation2 + $0x30] sm:$0xff]
    %v50 = vld [vmem:[#allocation2 + $0x38] sm:$0xff]
    %v51 = vld [vmem:[#allocation2 + $0x40] sm:$0xff]
    %v52 = vld [vmem:[#allocation2 + $0x48] sm:$0xff]
    %v53 = vld [vmem:[#allocation2 + $0x50] sm:$0xff]
    %v54 = vld [vmem:[#allocation2 + $0x58] sm:$0xff]
    %v55 = vld [vmem:[#allocation2 + $0x60] sm:$0xff]
    %v56 = vld [vmem:[#allocation2 + $0x68] sm:$0xff]
    %v57 = vld [vmem:[#allocation2 + $0x70] sm:$0xff]
    %v58 = vld [vmem:[#allocation2 + $0x78] sm:$0xff]
    %v59 = vadd.f32 %v43, %v45
    %v60 = vadd.f32 %v59, %v47
    %v61 = vadd.f32 %v60, %v49
    %v62 = vadd.f32 %v61, %v51
    %v63 = vadd.f32 %v62, %v53
    %v64 = vadd.f32 %v63, %v55
    %v65 = vadd.f32 %v64, %v57
    %v66 = vrot.slane %v65, 4
    %v67 = vadd.f32 %v65, %v66
    %v68 = vrot.slane %v67, 2
    %v69 = vadd.f32 %v67, %v68
    %v70 = vrot.slane %v69, 1
    %v71 = vadd.f32 %v69, %v70
    %v72 = vadd.f32 %v44, %v46
    %v73 = vadd.f32 %v72, %v48
    %v74 = vadd.f32 %v73, %v50
    %v75 = vadd.f32 %v74, %v52
    %v76 = vadd.f32 %v75, %v54
    %v77 = vadd.f32 %v76, %v56
    %v78 = vadd.f32 %v77, %v58
    %v79 = vrot.slane %v78, 4
    %v80 = vadd.f32 %v78, %v79
    %v81 = vrot.slane %v80, 2
    %v82 = vadd.f32 %v80, %v81
    %v83 = vrot.slane %v82, 1
    %v84 = vadd.f32 %v82, %v83
    %v85 = vrcp.pop 64.0
    %v86 = vmul.f32 %v71, %v85
    %v87 = vmul.f32 %v84, %v85
    %v88 = vsub.f32 %v43, %v86
    %v89 = vsub.f32 %v44, %v87
    %v90 = vsub.f32 %v45, %v86
    %v91 = vsub.f32 %v46, %v87
    %v92 = vsub.f32 %v47, %v86
    %v93 = vsub.f32 %v48, %v87
    %v94 = vsub.f32 %v49, %v86
    %v95 = vsub.f32 %v50, %v87
    %v96 = vsub.f32 %v51, %v86
    %v97 = vsub.f32 %v52, %v87
    %v98 = vsub.f32 %v53, %v86
    %v99 = vsub.f32 %v54, %v87
    %v100 = vsub.f32 %v55, %v86
    %v101 = vsub.f32 %v56, %v87
    %v102 = vsub.f32 %v57, %v86
    %v103 = vsub.f32 %v58, %v87
    %v104 = vmul.f32 %v88, %v88
    %v105 = vmul.f32 %v89, %v89
    %v106 = vmul.f32 %v90, %v90
    %v107 = vmul.f32 %v91, %v91
    %v108 = vmul.f32 %v92, %v92
    %v109 = vmul.f32 %v93, %v93
    %v110 = vmul.f32 %v94, %v94
    %v111 = vmul.f32 %v95, %v95
    %v112 = vmul.f32 %v96, %v96
    %v113 = vmul.f32 %v97, %v97
    %v114 = vmul.f32 %v98, %v98
    %v115 = vmul.f32 %v99, %v99
    %v116 = vmul.f32 %v100, %v100
    %v117 = vmul.f32 %v101, %v101
    %v118 = vmul.f32 %v102, %v102
    %v119 = vmul.f32 %v103, %v103
    %v120 = vadd.f32 %v104, %v106
    %v121 = vadd.f32 %v120, %v108
    %v122 = vadd.f32 %v121, %v110
    %v123 = vadd.f32 %v122, %v112
    %v124 = vadd.f32 %v123, %v114
    %v125 = vadd.f32 %v124, %v116
    %v126 = vadd.f32 %v125, %v118
    %v127 = vrot.slane %v126, 4
    %v128 = vadd.f32 %v126, %v127
    %v129 = vrot.slane %v128, 2
    %v130 = vadd.f32 %v128, %v129
    %v131 = vrot.slane %v130, 1
    %v132 = vadd.f32 %v130, %v131
    %v133 = vadd.f32 %v105, %v107
    %v134 = vadd.f32 %v133, %v109
    %v135 = vadd.f32 %v134, %v111
    %v136 = vadd.f32 %v135, %v113
    %v137 = vadd.f32 %v136, %v115
    %v138 = vadd.f32 %v137, %v117
    %v139 = vadd.f32 %v138, %v119
    %v140 = vrot.slane %v139, 4
    %v141 = vadd.f32 %v139, %v140
    %v142 = vrot.slane %v141, 2
    %v143 = vadd.f32 %v141, %v142
    %v144 = vrot.slane %v143, 1
    %v145 = vadd.f32 %v143, %v144
    %v146 = vmul.f32 %v132, %v85
    %v147 = vmul.f32 %v145, %v85
    %v148 = vadd.f32 %v146, 1e-05
    %v149 = vadd.f32 %v147, 1e-05
    %v150 = vrsqrt.pop %v148
    %v151 = vrsqrt.pop %v149
    %v152 = vmul.f32 %v88, %v150
    %v153 = vmul.f32 %v89, %v151
    %v154 = vmul.f32 %v90, %v150
    %v155 = vmul.f32 %v91, %v151
    %v156 = vmul.f32 %v92, %v150
    %v157 = vmul.f32 %v93, %v151
    %v158 = vmul.f32 %v94, %v150
    %v159 = vmul.f32 %v95, %v151
    %v160 = vmul.f32 %v96, %v150
    %v161 = vmul.f32 %v97, %v151
    %v162 = vmul.f32 %v98, %v150
    %v163 = vmul.f32 %v99, %v151
    %v164 = vmul.f32 %v100, %v150
    %v165 = vmul.f32 %v101, %v151
    %v166 = vmul.f32 %v102, %v150
    %v167 = vmul.f32 %v103, %v151
    %v168 = vpack.c.bf16 %v154, %v152
    %v169 = vpack.c.bf16 %v155, %v153
    %v170 = vpack.c.bf16 %v158, %v156
    %v171 = vpack.c.bf16 %v159, %v157
    %v172 = vpack.c.bf16 %v162, %v160
    %v173 = vpack.c.bf16 %v163, %v161
    %v174 = vpack.c.bf16 %v166, %v164
    %v175 = vpack.c.bf16 %v167, %v165
    %v184 = vunpack.c.l.b16 %v168
    %v185 = vunpack.c.l.b16 %v169
    %v186 = vunpack.c.h.b16 %v168
    %v187 = vunpack.c.h.b16 %v169
    %v188 = vunpack.c.l.b16 %v170
    %v189 = vunpack.c.l.b16 %v171
    %v190 = vunpack.c.h.b16 %v170
    %v191 = vunpack.c.h.b16 %v171
    %v192 = vunpack.c.l.b16 %v172
    %v193 = vunpack.c.l.b16 %v173
    %v194 = vunpack.c.h.b16 %v172
    %v195 = vunpack.c.h.b16 %v173
    %v196 = vunpack.c.l.b16 %v174
    %v197 = vunpack.c.l.b16 %v175
    %v198 = vunpack.c.h.b16 %v174
    %v199 = vunpack.c.h.b16 %v175
    %v200 = vpack.c.b16 %v185, %v184
    %v201 = vpack.c.b16 %v187, %v186
    %v202 = vpack.c.b16 %v189, %v188
    %v203 = vpack.c.b16 %v191, %v190
    %v204 = vpack.c.b16 %v193, %v192
    %v205 = vpack.c.b16 %v195, %v194
    %v206 = vpack.c.b16 %v197, %v196
    %v207 = vpack.c.b16 %v199, %v198
    %216 = vst [vmem:[#allocation7] sm:$0xff] %v200
    %217 = vst [vmem:[#allocation7 + $0x8] sm:$0xff] %v201
    %218 = vst [vmem:[#allocation7 + $0x10] sm:$0xff] %v202
    %219 = vst [vmem:[#allocation7 + $0x18] sm:$0xff] %v203
    %220 = vst [vmem:[#allocation7 + $0x20] sm:$0xff] %v204
    %221 = vst [vmem:[#allocation7 + $0x28] sm:$0xff] %v205
    %222 = vst [vmem:[#allocation7 + $0x30] sm:$0xff] %v206
    %223 = vst [vmem:[#allocation7 + $0x38] sm:$0xff] %v207
    %v224 = vld [vmem:[#allocation5] sm:$0xff]
    %v225 = vld [vmem:[#allocation5 + $0x8] sm:$0xff]
    %v226 = vld [vmem:[#allocation5 + $0x10] sm:$0xff]
    %v227 = vld [vmem:[#allocation5 + $0x18] sm:$0xff]
    %v228 = vld [vmem:[#allocation5 + $0x20] sm:$0xff]
    %v229 = vld [vmem:[#allocation5 + $0x28] sm:$0xff]
    %v230 = vld [vmem:[#allocation5 + $0x30] sm:$0xff]
    %v231 = vld [vmem:[#allocation5 + $0x38] sm:$0xff]
    %v232 = vld [vmem:[#allocation5 + $0x40] sm:$0xff]
    %v233 = vld [vmem:[#allocation5 + $0x48] sm:$0xff]
    %v234 = vld [vmem:[#allocation5 + $0x50] sm:$0xff]
    %v235 = vld [vmem:[#allocation5 + $0x58] sm:$0xff]
    %v236 = vld [vmem:[#allocation5 + $0x60] sm:$0xff]
    %v237 = vld [vmem:[#allocation5 + $0x68] sm:$0xff]
    %v238 = vld [vmem:[#allocation5 + $0x70] sm:$0xff]
    %v239 = vld [vmem:[#allocation5 + $0x78] sm:$0xff]
    %v240 = vadd.f32 %v224, %v226
    %v241 = vadd.f32 %v240, %v228
    %v242 = vadd.f32 %v241, %v230
    %v243 = vadd.f32 %v242, %v232
    %v244 = vadd.f32 %v243, %v234
    %v245 = vadd.f32 %v244, %v236
    %v246 = vadd.f32 %v245, %v238
    %v247 = vrot.slane %v246, 4
    %v248 = vadd.f32 %v246, %v247
    %v249 = vrot.slane %v248, 2
    %v250 = vadd.f32 %v248, %v249
    %v251 = vrot.slane %v250, 1
    %v252 = vadd.f32 %v250, %v251
    %v253 = vadd.f32 %v225, %v227
    %v254 = vadd.f32 %v253, %v229
    %v255 = vadd.f32 %v254, %v231
    %v256 = vadd.f32 %v255, %v233
    %v257 = vadd.f32 %v256, %v235
    %v258 = vadd.f32 %v257, %v237
    %v259 = vadd.f32 %v258, %v239
    %v260 = vrot.slane %v259, 4
    %v261 = vadd.f32 %v259, %v260
    %v262 = vrot.slane %v261, 2
    %v263 = vadd.f32 %v261, %v262
    %v264 = vrot.slane %v263, 1
    %v265 = vadd.f32 %v263, %v264
    %v266 = vmul.f32 %v252, %v85
    %v267 = vmul.f32 %v265, %v85
    %v268 = vsub.f32 %v224, %v266
    %v269 = vsub.f32 %v225, %v267
    %v270 = vsub.f32 %v226, %v266
    %v271 = vsub.f32 %v227, %v267
    %v272 = vsub.f32 %v228, %v266
    %v273 = vsub.f32 %v229, %v267
    %v274 = vsub.f32 %v230, %v266
    %v275 = vsub.f32 %v231, %v267
    %v276 = vsub.f32 %v232, %v266
    %v277 = vsub.f32 %v233, %v267
    %v278 = vsub.f32 %v234, %v266
    %v279 = vsub.f32 %v235, %v267
    %v280 = vsub.f32 %v236, %v266
    %v281 = vsub.f32 %v237, %v267
    %v282 = vsub.f32 %v238, %v266
    %v283 = vsub.f32 %v239, %v267
    %v284 = vmul.f32 %v268, %v268
    %v285 = vmul.f32 %v269, %v269
    %v286 = vmul.f32 %v270, %v270
    %v287 = vmul.f32 %v271, %v271
    %v288 = vmul.f32 %v272, %v272
    %v289 = vmul.f32 %v273, %v273
    %v290 = vmul.f32 %v274, %v274
    %v291 = vmul.f32 %v275, %v275
    %v292 = vmul.f32 %v276, %v276
    %v293 = vmul.f32 %v277, %v277
    %v294 = vmul.f32 %v278, %v278
    %v295 = vmul.f32 %v279, %v279
    %v296 = vmul.f32 %v280, %v280
    %v297 = vmul.f32 %v281, %v281
    %v298 = vmul.f32 %v282, %v282
    %v299 = vmul.f32 %v283, %v283
    %v300 = vadd.f32 %v284, %v286
    %v301 = vadd.f32 %v300, %v288
    %v302 = vadd.f32 %v301, %v290
    %v303 = vadd.f32 %v302, %v292
    %v304 = vadd.f32 %v303, %v294
    %v305 = vadd.f32 %v304, %v296
    %v306 = vadd.f32 %v305, %v298
    %v307 = vrot.slane %v306, 4
    %v308 = vadd.f32 %v306, %v307
    %v309 = vrot.slane %v308, 2
    %v310 = vadd.f32 %v308, %v309
    %v311 = vrot.slane %v310, 1
    %v312 = vadd.f32 %v310, %v311
    %v313 = vadd.f32 %v285, %v287
    %v314 = vadd.f32 %v313, %v289
    %v315 = vadd.f32 %v314, %v291
    %v316 = vadd.f32 %v315, %v293
    %v317 = vadd.f32 %v316, %v295
    %v318 = vadd.f32 %v317, %v297
    %v319 = vadd.f32 %v318, %v299
    %v320 = vrot.slane %v319, 4
    %v321 = vadd.f32 %v319, %v320
    %v322 = vrot.slane %v321, 2
    %v323 = vadd.f32 %v321, %v322
    %v324 = vrot.slane %v323, 1
    %v325 = vadd.f32 %v323, %v324
    %v326 = vmul.f32 %v312, %v85
    %v327 = vmul.f32 %v325, %v85
    %v328 = vadd.f32 %v326, 1e-05
    %v329 = vadd.f32 %v327, 1e-05
    %v330 = vrsqrt.pop %v328
    %v331 = vrsqrt.pop %v329
    %v332 = vmul.f32 %v268, %v330
    %v333 = vmul.f32 %v269, %v331
    %v334 = vmul.f32 %v270, %v330
    %v335 = vmul.f32 %v271, %v331
    %v336 = vmul.f32 %v272, %v330
    %v337 = vmul.f32 %v273, %v331
    %v338 = vmul.f32 %v274, %v330
    %v339 = vmul.f32 %v275, %v331
    %v340 = vmul.f32 %v276, %v330
    %v341 = vmul.f32 %v277, %v331
    %v342 = vmul.f32 %v278, %v330
    %v343 = vmul.f32 %v279, %v331
    %v344 = vmul.f32 %v280, %v330
    %v345 = vmul.f32 %v281, %v331
    %v346 = vmul.f32 %v282, %v330
    %v347 = vmul.f32 %v283, %v331
    %v348 = vpack.c.bf16 %v334, %v332
    %v349 = vpack.c.bf16 %v335, %v333
    %v350 = vpack.c.bf16 %v338, %v336
    %v351 = vpack.c.bf16 %v339, %v337
    %v352 = vpack.c.bf16 %v342, %v340
    %v353 = vpack.c.bf16 %v343, %v341
    %v354 = vpack.c.bf16 %v346, %v344
    %v355 = vpack.c.bf16 %v347, %v345
    %v364 = vunpack.c.l.b16 %v348
    %v365 = vunpack.c.l.b16 %v349
    %v366 = vunpack.c.h.b16 %v348
    %v367 = vunpack.c.h.b16 %v349
    %v368 = vunpack.c.l.b16 %v350
    %v369 = vunpack.c.l.b16 %v351
    %v370 = vunpack.c.h.b16 %v350
    %v371 = vunpack.c.h.b16 %v351
    %v372 = vunpack.c.l.b16 %v352
    %v373 = vunpack.c.l.b16 %v353
    %v374 = vunpack.c.h.b16 %v352
    %v375 = vunpack.c.h.b16 %v353
    %v376 = vunpack.c.l.b16 %v354
    %v377 = vunpack.c.l.b16 %v355
    %v378 = vunpack.c.h.b16 %v354
    %v379 = vunpack.c.h.b16 %v355
    %v380 = vpack.c.b16 %v365, %v364
    %v381 = vpack.c.b16 %v367, %v366
    %v382 = vpack.c.b16 %v369, %v368
    %v383 = vpack.c.b16 %v371, %v370
    %v384 = vpack.c.b16 %v373, %v372
    %v385 = vpack.c.b16 %v375, %v374
    %v386 = vpack.c.b16 %v377, %v376
    %v387 = vpack.c.b16 %v379, %v378
    %396 = vst [vmem:[#allocation8] sm:$0xff] %v380
    %397 = vst [vmem:[#allocation8 + $0x8] sm:$0xff] %v381
    %398 = vst [vmem:[#allocation8 + $0x10] sm:$0xff] %v382
    %399 = vst [vmem:[#allocation8 + $0x18] sm:$0xff] %v383
    %400 = vst [vmem:[#allocation8 + $0x20] sm:$0xff] %v384
    %401 = vst [vmem:[#allocation8 + $0x28] sm:$0xff] %v385
    %402 = vst [vmem:[#allocation8 + $0x30] sm:$0xff] %v386
    %403 = vst [vmem:[#allocation8 + $0x38] sm:$0xff] %v387
    // Predicated region
    $region18: #{tpu_custom_call.1} parent=1 // pred_check
      _
    $region19: #{tpu_custom_call.1} parent=1 // pred_check_branch
      %405 = sbr.rel (0) target = $region21
    $region20: #{tpu_custom_call.1} parent=1 // pred_region
      %s407 = ssub.s32 1024, 1024
      %408 = vsyncadd [#allocation4], %s407
      %s409 = sshll.u32 [#allocation7], 4
      %s410 = int_to_ptr.vmem [resolvable:$true] %s409
      %415 = dma.vmem_to_hbm [thread:$0]  %s410, 1024, %s2, [#allocation4], 128, 128, 8
    $region21: #{tpu_custom_call.1} parent=1 // pred_fallthru
      _
    // Predicated region
    $region22: #{tpu_custom_call.1} parent=1 // pred_check
      _
    $region23: #{tpu_custom_call.1} parent=1 // pred_check_branch
      %417 = sbr.rel (0) target = $region25
    $region24: #{tpu_custom_call.1} parent=1 // pred_region
      %s419 = ssub.s32 1024, 1024
      %420 = vsyncadd [#allocation9], %s419
      %s421 = sshll.u32 [#allocation8], 4
      %s422 = int_to_ptr.vmem [resolvable:$true] %s421
      %427 = dma.vmem_to_hbm [thread:$0]  %s422, 1024, %s3, [#allocation9], 128, 128, 8
    $region25: #{tpu_custom_call.1} parent=1 // pred_fallthru
      _
    // Predicated region
    $region26: #{tpu_custom_call.1} parent=1 // pred_check
      _
    $region27: #{tpu_custom_call.1} parent=1 // pred_check_branch
      %429 = sbr.rel (0) target = $region29
    $region28: #{tpu_custom_call.1} parent=1 // pred_region
      %430 = dma.done [#allocation4], 1024
    $region29: #{tpu_custom_call.1} parent=1 // pred_fallthru
      _
    // Predicated region
    $region30: #{tpu_custom_call.1} parent=1 // pred_check
      _
    $region31: #{tpu_custom_call.1} parent=1 // pred_check_branch
      %432 = sbr.rel (0) target = $region33
    $region32: #{tpu_custom_call.1} parent=1 // pred_region
      %433 = dma.done [#allocation9], 1024
    $region33: #{tpu_custom_call.1} parent=1 // pred_fallthru
      _
    %434 = vsyncpa [#allocation3], 1
    %435 = vsyncpa [#allocation6], 1
    %436 = vsyncpa [#allocation4], 1
    %437 = vsyncpa [#allocation9], 1

</llo_original>
